<compile_context>
chip_gen: v5e
topology: v5e:2x2
jax: 0.10.0
libtpu: 0.0.40
codegen_flags: <defaults>
</compile_context>

<pallas_src>
import jax
import jax.numpy as jnp
from jax.experimental import pallas as pl
from jax.experimental.pallas import tpu as pltpu


def _round_up(x, m):
    return ((x + m - 1) // m) * m


def _sublane(dtype):
    # Native sublane packing: 8 for 32-bit, 16 for 16-bit, 32 for 8-bit dtypes.
    bits = jnp.dtype(dtype).itemsize * 8
    return max(8, 256 // bits)


def _vmem_capacity_bytes():
    try:
        return int(pltpu.get_tpu_info().vmem_capacity_bytes)
    except Exception:
        return 64 << 20  # conservative fallback: v7x per-TensorCore VMEM


def _linear_kernel(x_ref, w_ref, b_ref, o_ref):
    # x_ref: [TM, K], w_ref: [K, N] (pre-transposed/block-diag), b_ref: [1, N] f32.
    acc = jnp.dot(x_ref[...], w_ref[...], preferred_element_type=jnp.float32)
    o_ref[...] = (acc + b_ref[...]).astype(o_ref.dtype)


def user_intent_prediction_head(hidden_state, weight, bias):
    """hidden_state: [..., H]; weight: [L, H] (PyTorch nn.Linear layout); bias: [L]."""
    *lead, H = hidden_state.shape
    L, Hw = weight.shape
    assert Hw == H, "weight must be [num_labels, hidden_size]"

    x2d = hidden_state.reshape(-1, H)
    M = x2d.shape[0]
    dtype = x2d.dtype
    itemsize = jnp.dtype(dtype).itemsize

    if M == 0:  # empty batch guard
        return jnp.zeros((*lead, L), dtype=dtype)

    # ---- Lane-dense repack (GEMV -> GEMM). Pick largest P (<=16) that divides M
    # and keeps K = H*P modest; P=1 falls back to the plain [M,H]@[H,L] path.
    P = 1
    for cand in (16, 8, 4, 2):
        if M % cand == 0 and H * cand <= 512:
            P = cand
            break

    Mp, K, N = M // P, H * P, L * P
    xp = x2d.reshape(Mp, K)                              # free, contiguous reshape
    w_t = weight.astype(dtype).T                         # [H, L], one-off transpose
    w_bd = jnp.kron(jnp.eye(P, dtype=dtype), w_t)        # [K, N] block-diagonal
    b_p = jnp.tile(bias.astype(jnp.float32), P).reshape(1, N)

    # ---- Tile selection: padding-aware VMEM accounting, generation-gated limit.
    sub = _sublane(dtype)
    k_lanes = _round_up(K, 128)
    n_lanes = _round_up(N, 128)

    vmem_limit = int(min(0.75 * _vmem_capacity_bytes(), 100 << 20))
    budget = vmem_limit // 2                             # headroom for Mosaic scratch

    w_bytes = _round_up(K, sub) * n_lanes * itemsize
    b_bytes = 8 * 128 * 4
    resident = 2 * (w_bytes + b_bytes)                   # resident W/b (counted x2)
    per_row = 2 * (k_lanes + n_lanes) * itemsize         # double-buffered x + out

    tm_vmem = max(sub, ((max(budget - resident, per_row) // per_row) // sub) * sub)
    # Bandwidth target: ~4 MiB of x per grid step amortizes per-step overhead.
    tm_bw = max(sub, _round_up((4 << 20) // max(K * itemsize, 1), sub))
    tm = min(tm_bw, tm_vmem)

    if Mp <= sub:
        tm = Mp                                          # full-extent tiny block
    else:
        tm = min(tm, _round_up(Mp, sub))
        # Prefer >=8 (else >=2) grid steps for v7x megacore / pipeline depth,
        # but only while each tile keeps >= ~1 MiB of x.
        tm_floor = max(sub, _round_up((1 << 20) // max(K * itemsize, 1), sub))
        for steps in (8, 2):
            cand = _round_up(pl.cdiv(Mp, steps), sub)
            if cand >= tm_floor:
                tm = min(tm, cand)
                break

    grid = (pl.cdiv(Mp, tm),)                            # partial last block masked

    footprint = resident + tm * per_row
    vmem_limit_bytes = int(min(vmem_limit, max(2 * footprint, 16 << 20)))

    cost = pl.CostEstimate(
        flops=2 * Mp * K * N,
        transcendentals=0,
        bytes_accessed=itemsize * (Mp * K + K * N + Mp * N) + 4 * N)

    out = pl.pallas_call(
        _linear_kernel,
        out_shape=jax.ShapeDtypeStruct((Mp, N), dtype),
        grid=grid,
        in_specs=[
            pl.BlockSpec((tm, K), lambda i: (i, 0)),     # x: streamed over M
            pl.BlockSpec((K, N), lambda i: (0, 0)),      # weight: VMEM-resident
            pl.BlockSpec((1, N), lambda i: (0, 0)),      # bias (f32): VMEM-resident
        ],
        out_specs=pl.BlockSpec((tm, N), lambda i: (i, 0)),
        compiler_params=pltpu.CompilerParams(
            dimension_semantics=("parallel",),           # v7x megacore sharding
            vmem_limit_bytes=vmem_limit_bytes),
        cost_estimate=cost,
    )(xp, w_bd, b_p)

    # (Mp, P*L) -> (M, L): row-major unpack undoes the block-diagonal packing.
    return out.reshape(*lead, L)


if __name__ == "__main__":
    # Small config consistent with the module: hidden_size=32, num_labels=8.
    batch, seq, hidden, num_labels = 2, 8, 32, 8

    key = jax.random.PRNGKey(0)
    k_x, k_w, k_b = jax.random.split(key, 3)

    hidden_state = jax.random.normal(k_x, (batch, seq, hidden), dtype=jnp.float32)
    # Deterministic "nn.Linear(hidden_size, num_labels)" parameters ([L, H] layout).
    weight = jax.random.normal(k_w, (num_labels, hidden), dtype=jnp.float32) * 0.02
    bias = jax.random.normal(k_b, (num_labels,), dtype=jnp.float32) * 0.02

    out = user_intent_prediction_head(hidden_state, weight, bias)
    out = jax.block_until_ready(out)

    # Reference check in plain JAX (same math as PyTorch nn.Linear).
    ref = hidden_state @ weight.T + bias
    assert out.shape == (batch, seq, num_labels)
    assert jnp.allclose(out, ref, atol=1e-5, rtol=1e-5)

    print("KERNEL_OK")
</pallas_src>

<mosaic_0001>
module attributes {stable_mosaic.version = 11 : i64} {
  func.func @_linear_kernel(%arg0: i32, %arg1: memref<1x512xf32, #tpu.memory_space<vmem>>, %arg2: memref<512x128xf32, #tpu.memory_space<vmem>>, %arg3: memref<1x128xf32, #tpu.memory_space<vmem>>, %arg4: memref<1x128xf32, #tpu.memory_space<vmem>>) attributes {dimension_semantics = [#tpu.dimension_semantics<parallel>], iteration_bounds = array<i64: 1>, scalar_prefetch = 0 : i64, scratch_operands = 0 : i64, tpu.core_type = #tpu.core_type<tc>, window_params = [{transform_indices = @transform_0, window_bounds = array<i64: 1, 512>}, {pipeline_mode = #tpu.pipeline_mode<synchronous>, transform_indices = @transform_1, window_bounds = array<i64: 512, 128>}, {pipeline_mode = #tpu.pipeline_mode<synchronous>, transform_indices = @transform_2, window_bounds = array<i64: 1, 128>}, {transform_indices = @transform_3, window_bounds = array<i64: 1, 128>}]} {
    %c0 = arith.constant 0 : index
    %c0_0 = arith.constant 0 : index
    %0 = vector.load %arg1[%c0, %c0_0] : memref<1x512xf32, #tpu.memory_space<vmem>>, vector<1x512xf32>
    %c0_1 = arith.constant 0 : index
    %c0_2 = arith.constant 0 : index
    %1 = vector.load %arg2[%c0_1, %c0_2] : memref<512x128xf32, #tpu.memory_space<vmem>>, vector<512x128xf32>
    %cst = arith.constant dense<0.000000e+00> : vector<1x128xf32>
    %2 = tpu.matmul %0, %1, %cst {dimension_numbers = #tpu.dot_dimension_numbers<[1], [0], [0], [1], [0, 0, 1, 1], [], []>} : vector<1x512xf32>, vector<512x128xf32>, vector<1x128xf32> -> vector<1x128xf32>
    %c0_3 = arith.constant 0 : index
    %c0_4 = arith.constant 0 : index
    %3 = vector.load %arg3[%c0_3, %c0_4] : memref<1x128xf32, #tpu.memory_space<vmem>>, vector<1x128xf32>
    %4 = arith.addf %2, %3 : vector<1x128xf32>
    %c0_5 = arith.constant 0 : index
    %c0_6 = arith.constant 0 : index
    %5 = vector.load %arg4[%c0_5, %c0_6] : memref<1x128xf32, #tpu.memory_space<vmem>>, vector<1x128xf32>
    tpu.vector_store %arg4[%c0_5, %c0_6], %4 {strides = array<i32>} : memref<1x128xf32, #tpu.memory_space<vmem>>, vector<1x128xf32>,
    return
  }
  func.func @transform_0(%arg0: i32) -> (i32, i32) {
    %c0_i32 = arith.constant 0 : i32
    %c0_i32_0 = arith.constant 0 : i32
    return %arg0, %c0_i32 : i32, i32
  }
  func.func @transform_1(%arg0: i32) -> (i32, i32) {
    %c0_i32 = arith.constant 0 : i32
    %c0_i32_0 = arith.constant 0 : i32
    %c0_i32_1 = arith.constant 0 : i32
    return %c0_i32, %c0_i32_0 : i32, i32
  }
  func.func @transform_2(%arg0: i32) -> (i32, i32) {
    %c0_i32 = arith.constant 0 : i32
    %c0_i32_0 = arith.constant 0 : i32
    %c0_i32_1 = arith.constant 0 : i32
    return %c0_i32, %c0_i32_0 : i32, i32
  }
  func.func @transform_3(%arg0: i32) -> (i32, i32) {
    %c0_i32 = arith.constant 0 : i32
    %c0_i32_0 = arith.constant 0 : i32
    return %arg0, %c0_i32 : i32, i32
  }
}

</mosaic_0001>

<llo_original>
// kernel: tpu_custom_call.1
$region0: #{tpu_custom_call.1}
  #allocation0 [shape = 'u32[]', space=smem, size = 0x4, offset = 0x4, fixed_abs, tag = 'smem constant byte address 0x4 - core index']
  #allocation1 [shape = 'u32[72,128]{1,0:T(1,128)}', space=vmem, size = 0x9000, scoped, tag = 'internal scratch']
  %s0 = inlined_call_operand.hbm [shape: f32[1,512], index: 0, kind: input, shape index: {}]
  %s1 = inlined_call_operand.hbm [shape: f32[512,128], index: 1, kind: input, shape index: {}]
  %s2 = inlined_call_operand.vmem [shape: f32[1,128], index: 2, kind: input, shape index: {}]
  %s3 = inlined_call_operand.hbm [shape: f32[1,128], index: 3, kind: output, shape index: {}]
  %s4 = sld [smem:[#allocation0]]
  $region30: #{tpu_custom_call.1} parent=0
    _
  %s6 = ssub.s32 1, %s4
  %s7 = scalar_select 0, %s6, %s4
  $region1: #{tpu_custom_call.1} parent=0
    #allocation2 [shape = 'u8[2048]{0}', space=vmem, size = 0x800, scoped, tag = 'input window, operand 0, single buffered']
    #allocation3 [shape = 's32[1]{0}', space=sflag, size = 0x4, scoped, tag = 'scoped memory for tpu_custom_call.1']
    #allocation4 [shape = 's32[1]{0}', space=sflag, size = 0x4, scoped, tag = 'scoped memory for tpu_custom_call.1']
    #allocation5 [shape = 'u8[262144]{0}', space=vmem, size = 0x40000, scoped, tag = 'input window, operand 1, single buffered']
    #allocation6 [shape = 's32[1]{0}', space=sflag, size = 0x4, scoped, tag = 'scoped memory for tpu_custom_call.1']
    #allocation7 [shape = 'u8[512]{0}', space=vmem, size = 0x400, scoped, tag = 'output window, operand 0, single buffered']
    %8 = vsyncpa [#allocation3], 0
    %9 = vsyncpa [#allocation6], 0
    %10 = vsyncpa [#allocation4], 0
    // Predicated region
    $region2: #{tpu_custom_call.1} parent=1 // pred_check
      _
    $region3: #{tpu_custom_call.1} parent=1 // pred_check_branch
      %12 = sbr.rel (0) target = $region5
    $region4: #{tpu_custom_call.1} parent=1 // pred_region
      %14 = vsyncadd [#allocation3], 0
      %s16 = sshll.u32 %s0, 4
      %s17 = int_to_ptr.hbm [resolvable:$true] %s16
      %s18 = sshll.u32 [#allocation2], 4
      %s19 = int_to_ptr.vmem [resolvable:$true] %s18
      %21 = dma.hbm_to_vmem [thread:$0]  %s17, 64, %s19, [#allocation3]
    $region5: #{tpu_custom_call.1} parent=1 // pred_fallthru
      _
    // Predicated region
    $region6: #{tpu_custom_call.1} parent=1 // pred_check
      _
    $region7: #{tpu_custom_call.1} parent=1 // pred_check_branch
      %23 = sbr.rel (0) target = $region9
    $region8: #{tpu_custom_call.1} parent=1 // pred_region
      %25 = vsyncadd [#allocation6], 0
      %s26 = sshll.u32 %s1, 4
      %s27 = int_to_ptr.hbm [resolvable:$true] %s26
      %s28 = sshll.u32 [#allocation5], 4
      %s29 = int_to_ptr.vmem [resolvable:$true] %s28
      %34 = dma.hbm_to_vmem [thread:$0]  %s27, 8192, %s29, [#allocation6], 128, 128, 8
    $region9: #{tpu_custom_call.1} parent=1 // pred_fallthru
      _
    // Predicated region
    $region10: #{tpu_custom_call.1} parent=1 // pred_check
      _
    $region11: #{tpu_custom_call.1} parent=1 // pred_check_branch
      %36 = sbr.rel (0) target = $region13
    $region12: #{tpu_custom_call.1} parent=1 // pred_region
      _
    $region13: #{tpu_custom_call.1} parent=1 // pred_fallthru
      _
    // Predicated region
    $region14: #{tpu_custom_call.1} parent=1 // pred_check
      _
    $region15: #{tpu_custom_call.1} parent=1 // pred_check_branch
      %38 = sbr.rel (0) target = $region17
    $region16: #{tpu_custom_call.1} parent=1 // pred_region
      %40 = dma.done [#allocation3], 64
    $region17: #{tpu_custom_call.1} parent=1 // pred_fallthru
      _
    // Predicated region
    $region18: #{tpu_custom_call.1} parent=1 // pred_check
      _
    $region19: #{tpu_custom_call.1} parent=1 // pred_check_branch
      %42 = sbr.rel (0) target = $region21
    $region20: #{tpu_custom_call.1} parent=1 // pred_region
      %44 = dma.done [#allocation6], 8192
    $region21: #{tpu_custom_call.1} parent=1 // pred_fallthru
      _
    %v45 = vld [vmem:[#allocation2] sm:$0xf]
    %v46 = vld [vmem:[#allocation5] sm:$0xff]
    %v47 = vld [vmem:[#allocation5 + $0x8] sm:$0xff]
    %v48 = vld [vmem:[#allocation5 + $0x10] sm:$0xff]
    %v49 = vld [vmem:[#allocation5 + $0x18] sm:$0xff]
    %v50 = vld [vmem:[#allocation5 + $0x20] sm:$0xff]
    %v51 = vld [vmem:[#allocation5 + $0x28] sm:$0xff]
    %v52 = vld [vmem:[#allocation5 + $0x30] sm:$0xff]
    %v53 = vld [vmem:[#allocation5 + $0x38] sm:$0xff]
    %v54 = vld [vmem:[#allocation5 + $0x40] sm:$0xff]
    %v55 = vld [vmem:[#allocation5 + $0x48] sm:$0xff]
    %v56 = vld [vmem:[#allocation5 + $0x50] sm:$0xff]
    %v57 = vld [vmem:[#allocation5 + $0x58] sm:$0xff]
    %v58 = vld [vmem:[#allocation5 + $0x60] sm:$0xff]
    %v59 = vld [vmem:[#allocation5 + $0x68] sm:$0xff]
    %v60 = vld [vmem:[#allocation5 + $0x70] sm:$0xff]
    %v61 = vld [vmem:[#allocation5 + $0x78] sm:$0xff]
    %v62 = vld [vmem:[#allocation5 + $0x80] sm:$0xff]
    %v63 = vld [vmem:[#allocation5 + $0x88] sm:$0xff]
    %v64 = vld [vmem:[#allocation5 + $0x90] sm:$0xff]
    %v65 = vld [vmem:[#allocation5 + $0x98] sm:$0xff]
    %v66 = vld [vmem:[#allocation5 + $0xa0] sm:$0xff]
    %v67 = vld [vmem:[#allocation5 + $0xa8] sm:$0xff]
    %v68 = vld [vmem:[#allocation5 + $0xb0] sm:$0xff]
    %v69 = vld [vmem:[#allocation5 + $0xb8] sm:$0xff]
    %v70 = vld [vmem:[#allocation5 + $0xc0] sm:$0xff]
    %v71 = vld [vmem:[#allocation5 + $0xc8] sm:$0xff]
    %v72 = vld [vmem:[#allocation5 + $0xd0] sm:$0xff]
    %v73 = vld [vmem:[#allocation5 + $0xd8] sm:$0xff]
    %v74 = vld [vmem:[#allocation5 + $0xe0] sm:$0xff]
    %v75 = vld [vmem:[#allocation5 + $0xe8] sm:$0xff]
    %v76 = vld [vmem:[#allocation5 + $0xf0] sm:$0xff]
    %v77 = vld [vmem:[#allocation5 + $0xf8] sm:$0xff]
    %v78 = vld [vmem:[#allocation5 + $0x100] sm:$0xff]
    %v79 = vld [vmem:[#allocation5 + $0x108] sm:$0xff]
    %v80 = vld [vmem:[#allocation5 + $0x110] sm:$0xff]
    %v81 = vld [vmem:[#allocation5 + $0x118] sm:$0xff]
    %v82 = vld [vmem:[#allocation5 + $0x120] sm:$0xff]
    %v83 = vld [vmem:[#allocation5 + $0x128] sm:$0xff]
    %v84 = vld [vmem:[#allocation5 + $0x130] sm:$0xff]
    %v85 = vld [vmem:[#allocation5 + $0x138] sm:$0xff]
    %v86 = vld [vmem:[#allocation5 + $0x140] sm:$0xff]
    %v87 = vld [vmem:[#allocation5 + $0x148] sm:$0xff]
    %v88 = vld [vmem:[#allocation5 + $0x150] sm:$0xff]
    %v89 = vld [vmem:[#allocation5 + $0x158] sm:$0xff]
    %v90 = vld [vmem:[#allocation5 + $0x160] sm:$0xff]
    %v91 = vld [vmem:[#allocation5 + $0x168] sm:$0xff]
    %v92 = vld [vmem:[#allocation5 + $0x170] sm:$0xff]
    %v93 = vld [vmem:[#allocation5 + $0x178] sm:$0xff]
    %v94 = vld [vmem:[#allocation5 + $0x180] sm:$0xff]
    %v95 = vld [vmem:[#allocation5 + $0x188] sm:$0xff]
    %v96 = vld [vmem:[#allocation5 + $0x190] sm:$0xff]
    %v97 = vld [vmem:[#allocation5 + $0x198] sm:$0xff]
    %v98 = vld [vmem:[#allocation5 + $0x1a0] sm:$0xff]
    %v99 = vld [vmem:[#allocation5 + $0x1a8] sm:$0xff]
    %v100 = vld [vmem:[#allocation5 + $0x1b0] sm:$0xff]
    %v101 = vld [vmem:[#allocation5 + $0x1b8] sm:$0xff]
    %v102 = vld [vmem:[#allocation5 + $0x1c0] sm:$0xff]
    %v103 = vld [vmem:[#allocation5 + $0x1c8] sm:$0xff]
    %v104 = vld [vmem:[#allocation5 + $0x1d0] sm:$0xff]
    %v105 = vld [vmem:[#allocation5 + $0x1d8] sm:$0xff]
    %v106 = vld [vmem:[#allocation5 + $0x1e0] sm:$0xff]
    %v107 = vld [vmem:[#allocation5 + $0x1e8] sm:$0xff]
    %v108 = vld [vmem:[#allocation5 + $0x1f0] sm:$0xff]
    %v109 = vld [vmem:[#allocation5 + $0x1f8] sm:$0xff]
    %v110 = vld [vmem:[%s2] sm:$0x1]
    %v112 = vperm.slane %v45, 0
    %v113 = vperm.slane %v45, 1
    %v114 = vperm.slane %v45, 2
    %v115 = vperm.slane %v45, 3
    %120 = vmatpush.msra.mxu0 %v61
    %121 = vmatpush.msra.mxu0 %v60
    %122 = vmatpush.msra.mxu0 %v59
    %123 = vmatpush.msra.mxu0 %v58
    %124 = vmatpush.msra.mxu0 %v57
    %125 = vmatpush.msra.mxu0 %v56
    %126 = vmatpush.msra.mxu0 %v55
    %127 = vmatpush.msra.mxu0 %v54
    %128 = vmatpush.msra.mxu0 %v53
    %129 = vmatpush.msra.mxu0 %v52
    %130 = vmatpush.msra.mxu0 %v51
    %131 = vmatpush.msra.mxu0 %v50
    %132 = vmatpush.msra.mxu0 %v49
    %133 = vmatpush.msra.mxu0 %v48
    %134 = vmatpush.msra.mxu0 %v47
    %135 = vmatpush.msra.mxu0 %v46
    %136 = vmatmul.f32.gmra.mxu0 %v112
    %v137 = vpop.f32.mrf.mxu0
    %v138 = vadd.f32 %v110, %v137
    %139 = vdwg.mxu0
    %140 = vmatpush.msra.mxu0 %v77
    %141 = vmatpush.msra.mxu0 %v76
    %142 = vmatpush.msra.mxu0 %v75
    %143 = vmatpush.msra.mxu0 %v74
    %144 = vmatpush.msra.mxu0 %v73
    %145 = vmatpush.msra.mxu0 %v72
    %146 = vmatpush.msra.mxu0 %v71
    %147 = vmatpush.msra.mxu0 %v70
    %148 = vmatpush.msra.mxu0 %v69
    %149 = vmatpush.msra.mxu0 %v68
    %150 = vmatpush.msra.mxu0 %v67
    %151 = vmatpush.msra.mxu0 %v66
    %152 = vmatpush.msra.mxu0 %v65
    %153 = vmatpush.msra.mxu0 %v64
    %154 = vmatpush.msra.mxu0 %v63
    %155 = vmatpush.msra.mxu0 %v62
    %156 = vmatmul.f32.gmra.mxu0 %v113
    %v157 = vpop.f32.mrf.mxu0
    %v158 = vadd.f32 %v138, %v157
    %159 = vdwg.mxu0
    %160 = vmatpush.msra.mxu0 %v93
    %161 = vmatpush.msra.mxu0 %v92
    %162 = vmatpush.msra.mxu0 %v91
    %163 = vmatpush.msra.mxu0 %v90
    %164 = vmatpush.msra.mxu0 %v89
    %165 = vmatpush.msra.mxu0 %v88
    %166 = vmatpush.msra.mxu0 %v87
    %167 = vmatpush.msra.mxu0 %v86
    %168 = vmatpush.msra.mxu0 %v85
    %169 = vmatpush.msra.mxu0 %v84
    %170 = vmatpush.msra.mxu0 %v83
    %171 = vmatpush.msra.mxu0 %v82
    %172 = vmatpush.msra.mxu0 %v81
    %173 = vmatpush.msra.mxu0 %v80
    %174 = vmatpush.msra.mxu0 %v79
    %175 = vmatpush.msra.mxu0 %v78
    %176 = vmatmul.f32.gmra.mxu0 %v114
    %v177 = vpop.f32.mrf.mxu0
    %v178 = vadd.f32 %v158, %v177
    %179 = vdwg.mxu0
    %180 = vmatpush.msra.mxu0 %v109
    %181 = vmatpush.msra.mxu0 %v108
    %182 = vmatpush.msra.mxu0 %v107
    %183 = vmatpush.msra.mxu0 %v106
    %184 = vmatpush.msra.mxu0 %v105
    %185 = vmatpush.msra.mxu0 %v104
    %186 = vmatpush.msra.mxu0 %v103
    %187 = vmatpush.msra.mxu0 %v102
    %188 = vmatpush.msra.mxu0 %v101
    %189 = vmatpush.msra.mxu0 %v100
    %190 = vmatpush.msra.mxu0 %v99
    %191 = vmatpush.msra.mxu0 %v98
    %192 = vmatpush.msra.mxu0 %v97
    %193 = vmatpush.msra.mxu0 %v96
    %194 = vmatpush.msra.mxu0 %v95
    %195 = vmatpush.msra.mxu0 %v94
    %196 = vmatmul.f32.gmra.mxu0 %v115
    %v197 = vpop.f32.mrf.mxu0
    %v198 = vadd.f32 %v178, %v197
    %199 = vdwg.mxu0
    %200 = vst [vmem:[#allocation7] sm:$0x1] %v198
    // Predicated region
    $region22: #{tpu_custom_call.1} parent=1 // pred_check
      _
    $region23: #{tpu_custom_call.1} parent=1 // pred_check_branch
      %202 = sbr.rel (0) target = $region25
    $region24: #{tpu_custom_call.1} parent=1 // pred_region
      %204 = vsyncadd [#allocation4], 0
      %s206 = sshll.u32 [#allocation7], 4
      %s207 = int_to_ptr.vmem [resolvable:$true] %s206
      %s208 = sshll.u32 %s3, 4
      %s209 = int_to_ptr.hbm [resolvable:$true] %s208
      %211 = dma.vmem_to_hbm [thread:$0]  %s207, 16, %s209, [#allocation4]
    $region25: #{tpu_custom_call.1} parent=1 // pred_fallthru
      _
    // Predicated region
    $region26: #{tpu_custom_call.1} parent=1 // pred_check
      _
    $region27: #{tpu_custom_call.1} parent=1 // pred_check_branch
      %213 = sbr.rel (0) target = $region29
    $region28: #{tpu_custom_call.1} parent=1 // pred_region
      %215 = dma.done [#allocation4], 16
    $region29: #{tpu_custom_call.1} parent=1 // pred_fallthru
      _
    %216 = vsyncpa [#allocation3], 1
    %217 = vsyncpa [#allocation6], 1
    %218 = vsyncpa [#allocation4], 1

</llo_original>
